<compile_context>
chip_gen: v6e
topology: v6e:2x2x1
jax: 0.10.0
libtpu: 0.0.40
codegen_flags: <defaults>
</compile_context>

<pallas_src>
import functools

import jax
import jax.numpy as jnp
from jax.experimental import pallas as pl
from jax.experimental.pallas import tpu as pltpu


def _round_up(x: int, m: int) -> int:
    return ((x + m - 1) // m) * m


def _focal_loss_kernel(logits_ref, targets_ref, alpha_ref, out_ref, acc_ref,
                       *, gamma: float, scale: float):
    i = pl.program_id(0)

    @pl.when(i == 0)
    def _():
        acc_ref[...] = jnp.zeros_like(acc_ref)

    x = logits_ref[...].astype(jnp.float32)          # (TILE_N, C)
    t = targets_ref[...]                             # (TILE_N, 1) int32
    a = alpha_ref[...].astype(jnp.float32)           # (TILE_N, 1), 0 on padded rows

    tn, c = x.shape

    # one-hot target mask (scatter_(1, ids, 1.0) equivalent)
    col = jax.lax.broadcasted_iota(jnp.int32, (tn, c), 1)
    mask = col == t                                   # (TILE_N, C) bool

    # log softmax of the target class via log-sum-exp (no full softmax materialized)
    m = jnp.max(x, axis=1, keepdims=True)                               # (TILE_N, 1)
    e = jnp.exp(x - m)                                                  # (TILE_N, C)
    s = jnp.sum(e, axis=1, keepdims=True)                               # (TILE_N, 1)
    x_t = jnp.sum(jnp.where(mask, x, 0.0), axis=1, keepdims=True)       # target logit

    log_p = (x_t - m) - jnp.log(s)            # exact log P[target], always <= 0
    probs = jnp.exp(log_p)                    # in (0, 1]

    if gamma == 2.0:
        focal = (1.0 - probs) * (1.0 - probs)
    else:
        focal = jnp.power(jnp.maximum(1.0 - probs, 0.0), gamma)

    batch_loss = -a * focal * log_p           # (TILE_N, 1); padded rows -> 0 (a == 0)

    acc_ref[...] += jnp.sum(batch_loss)

    @pl.when(i == pl.num_programs(0) - 1)
    def _():
        out_ref[...] = acc_ref[...] * scale


def focal_loss(logits, targets, alpha, *, gamma=2.0, size_average=True):
    """logits: (N, C) float; targets: (N,) int; alpha: (C, 1) or (C,) float."""
    n, c = logits.shape
    targets = targets.astype(jnp.int32)

    # Gather alpha[targets] once in the wrapper (O(N) XLA op, not per-tile kernel work).
    alpha_flat = jnp.reshape(alpha, (-1,)).astype(jnp.float32)
    alpha_g = alpha_flat[targets]                                  # (N,)

    # Tile over N; tile rows must be a multiple of 8 (sublane granularity).
    tile_n = min(512, _round_up(n, 8))
    n_pad = _round_up(n, tile_n)
    num_tiles = n_pad // tile_n
    pad = n_pad - n

    logits_p = jnp.pad(logits, ((0, pad), (0, 0)))
    targets_p = jnp.pad(targets, (0, pad)).reshape(n_pad, 1)
    # padded rows get alpha 0 -> zero loss contribution (masks the remainder tile)
    alpha_p = jnp.pad(alpha_g, (0, pad)).reshape(n_pad, 1)

    scale = (1.0 / float(n)) if size_average else 1.0

    kernel = functools.partial(_focal_loss_kernel, gamma=float(gamma), scale=scale)

    out = pl.pallas_call(
        kernel,
        out_shape=jax.ShapeDtypeStruct((1, 1), jnp.float32),
        grid_spec=pltpu.PrefetchScalarGridSpec(
            num_scalar_prefetch=0,
            grid=(num_tiles,),
            in_specs=[
                pl.BlockSpec((tile_n, c), lambda i: (i, 0)),   # logits tile
                pl.BlockSpec((tile_n, 1), lambda i: (i, 0)),   # targets tile
                pl.BlockSpec((tile_n, 1), lambda i: (i, 0)),   # gathered alpha tile
            ],
            out_specs=pl.BlockSpec((1, 1), lambda i: (0, 0)),
            scratch_shapes=[pltpu.VMEM((1, 1), jnp.float32)],  # running loss accumulator
        ),
        compiler_params=pltpu.CompilerParams(
            dimension_semantics=("arbitrary",),                # accumulating N axis
            vmem_limit_bytes=32 * 1024 * 1024,
        ),
    )(logits_p, targets_p, alpha_p)
    return out[0, 0]


def _focal_loss_ref(logits, targets, alpha, *, gamma=2.0, size_average=True):
    # Pure-JAX reference for sanity checking.
    p = jax.nn.softmax(logits.astype(jnp.float32), axis=1)
    n = logits.shape[0]
    probs = p[jnp.arange(n), targets]
    alpha_g = jnp.reshape(alpha, (-1,))[targets]
    batch_loss = -alpha_g * jnp.power(1.0 - probs, gamma) * jnp.log(probs)
    return jnp.mean(batch_loss) if size_average else jnp.sum(batch_loss)


if __name__ == "__main__":
    key = jax.random.PRNGKey(0)
    k_logits, k_targets = jax.random.split(key)

    # N=10 (exercises the padded remainder tile), C=16 classes.
    N, C = 10, 16
    logits = jax.random.normal(k_logits, (N, C), dtype=jnp.float32)
    targets = jax.random.randint(k_targets, (N,), 0, C, dtype=jnp.int32)
    # alpha=None in the module -> ones of shape (class_num, 1)
    alpha = jnp.ones((C, 1), dtype=jnp.float32)

    loss_mean = focal_loss(logits, targets, alpha, gamma=2.0, size_average=True)
    loss_mean = jax.block_until_ready(loss_mean)
    ref_mean = _focal_loss_ref(logits, targets, alpha, gamma=2.0, size_average=True)
    assert jnp.allclose(loss_mean, ref_mean, atol=1e-5, rtol=1e-5), (loss_mean, ref_mean)

    loss_sum = focal_loss(logits, targets, alpha, gamma=2.0, size_average=False)
    loss_sum = jax.block_until_ready(loss_sum)
    ref_sum = _focal_loss_ref(logits, targets, alpha, gamma=2.0, size_average=False)
    assert jnp.allclose(loss_sum, ref_sum, atol=1e-5, rtol=1e-5), (loss_sum, ref_sum)

    print("KERNEL_OK")
</pallas_src>

<mosaic_0001>
module attributes {stable_mosaic.version = 11 : i64} {
  func.func @_focal_loss_kernel(%arg0: i32, %arg1: memref<16x16xf32, #tpu.memory_space<vmem>>, %arg2: memref<16x1xi32, #tpu.memory_space<vmem>>, %arg3: memref<16x1xf32, #tpu.memory_space<vmem>>, %arg4: memref<1x1xf32, #tpu.memory_space<vmem>>, %arg5: memref<1x1xf32, #tpu.memory_space<vmem>>) attributes {dimension_semantics = [#tpu.dimension_semantics<arbitrary>], iteration_bounds = array<i64: 1>, scalar_prefetch = 0 : i64, scratch_operands = 1 : i64, tpu.core_type = #tpu.core_type<tc>, window_params = [{transform_indices = @transform_0, window_bounds = array<i64: 16, 16>}, {transform_indices = @transform_1, window_bounds = array<i64: 16, 1>}, {transform_indices = @transform_2, window_bounds = array<i64: 16, 1>}, {pipeline_mode = #tpu.pipeline_mode<synchronous>, transform_indices = @transform_3, window_bounds = array<i64: 1, 1>}]} {
    %c0_i32 = arith.constant 0 : i32
    %0 = arith.cmpi eq, %arg0, %c0_i32 : i32
    %1 = arith.extui %0 : i1 to i32
    %c0_i32_0 = arith.constant 0 : i32
    %2 = arith.cmpi ne, %1, %c0_i32_0 : i32
    scf.if %2 {
      %cst_19 = arith.constant 0.000000e+00 : f32
      %44 = vector.broadcast %cst_19 : f32 to vector<1x1xf32>
      %c0_20 = arith.constant 0 : index
      %c0_21 = arith.constant 0 : index
      %45 = vector.load %arg5[%c0_20, %c0_21] : memref<1x1xf32, #tpu.memory_space<vmem>>, vector<1x1xf32>
      tpu.vector_store %arg5[%c0_20, %c0_21], %44 {strides = array<i32>} : memref<1x1xf32, #tpu.memory_space<vmem>>, vector<1x1xf32>,
    } else {
    }
    %c0 = arith.constant 0 : index
    %c0_1 = arith.constant 0 : index
    %3 = vector.load %arg1[%c0, %c0_1] : memref<16x16xf32, #tpu.memory_space<vmem>>, vector<16x16xf32>
    %c0_2 = arith.constant 0 : index
    %c0_3 = arith.constant 0 : index
    %4 = vector.load %arg2[%c0_2, %c0_3] : memref<16x1xi32, #tpu.memory_space<vmem>>, vector<16x1xi32>
    %c0_4 = arith.constant 0 : index
    %c0_5 = arith.constant 0 : index
    %5 = vector.load %arg3[%c0_4, %c0_5] : memref<16x1xf32, #tpu.memory_space<vmem>>, vector<16x1xf32>
    %6 = tpu.iota {dimensions = array<i32: 1>} : vector<16x16xi32>
    %7 = vector.broadcast %4 : vector<16x1xi32> to vector<16x16xi32>
    %8 = arith.cmpi eq, %6, %7 : vector<16x16xi32>
    %cst = arith.constant dense<0xFF800000> : vector<16xf32>
    %9 = vector.multi_reduction <maximumf>, %3, %cst [1] : vector<16x16xf32> to vector<16xf32>
    %10 = vector.shape_cast %9 : vector<16xf32> to vector<16x1xf32>
    %11 = vector.broadcast %10 : vector<16x1xf32> to vector<16x16xf32>
    %12 = arith.subf %3, %11 : vector<16x16xf32>
    %13 = math.exp %12 : vector<16x16xf32>
    %cst_6 = arith.constant dense<0.000000e+00> : vector<16xf32>
    %14 = vector.multi_reduction <add>, %13, %cst_6 [1] : vector<16x16xf32> to vector<16xf32>
    %15 = vector.shape_cast %14 : vector<16xf32> to vector<16x1xf32>
    %cst_7 = arith.constant 0.000000e+00 : f32
    %16 = vector.broadcast %cst_7 : f32 to vector<16x16xf32>
    %17 = arith.select %8, %3, %16 : vector<16x16xi1>, vector<16x16xf32>
    %cst_8 = arith.constant dense<0.000000e+00> : vector<16xf32>
    %18 = vector.multi_reduction <add>, %17, %cst_8 [1] : vector<16x16xf32> to vector<16xf32>
    %19 = vector.shape_cast %18 : vector<16xf32> to vector<16x1xf32>
    %20 = arith.subf %19, %10 : vector<16x1xf32>
    %21 = math.log %15 : vector<16x1xf32>
    %22 = arith.subf %20, %21 : vector<16x1xf32>
    %23 = math.exp %22 : vector<16x1xf32>
    %cst_9 = arith.constant 1.000000e+00 : f32
    %24 = vector.broadcast %cst_9 : f32 to vector<16x1xf32>
    %25 = arith.subf %24, %23 : vector<16x1xf32>
    %cst_10 = arith.constant 1.000000e+00 : f32
    %26 = vector.broadcast %cst_10 : f32 to vector<16x1xf32>
    %27 = arith.subf %26, %23 : vector<16x1xf32>
    %28 = arith.mulf %25, %27 : vector<16x1xf32>
    %cst_11 = arith.constant 0.000000e+00 : f32
    %29 = vector.broadcast %cst_11 : f32 to vector<16x1xf32>
    %30 = arith.subf %29, %5 : vector<16x1xf32>
    %31 = arith.mulf %30, %28 : vector<16x1xf32>
    %32 = arith.mulf %31, %22 : vector<16x1xf32>
    %c0_12 = arith.constant 0 : index
    %c0_13 = arith.constant 0 : index
    %33 = vector.load %arg5[%c0_12, %c0_13] : memref<1x1xf32, #tpu.memory_space<vmem>>, vector<1x1xf32>
    %34 = vector.shape_cast %32 : vector<16x1xf32> to vector<1x16x1xf32>
    %cst_14 = arith.constant dense<0.000000e+00> : vector<1xf32>
    %35 = vector.multi_reduction <add>, %34, %cst_14 [1, 2] : vector<1x16x1xf32> to vector<1xf32>
    %36 = vector.shape_cast %35 : vector<1xf32> to vector<1x1x1xf32>
    %37 = vector.extract %36[0, 0, 0] : f32 from vector<1x1x1xf32>
    %38 = vector.broadcast %37 : f32 to vector<1x1xf32>
    %39 = arith.addf %33, %38 : vector<1x1xf32>
    %c0_15 = arith.constant 0 : index
    %c0_16 = arith.constant 0 : index
    %40 = vector.load %arg5[%c0_15, %c0_16] : memref<1x1xf32, #tpu.memory_space<vmem>>, vector<1x1xf32>
    tpu.vector_store %arg5[%c0_15, %c0_16], %39 {strides = array<i32>} : memref<1x1xf32, #tpu.memory_space<vmem>>, vector<1x1xf32>,
    %c0_i32_17 = arith.constant 0 : i32
    %41 = arith.cmpi eq, %arg0, %c0_i32_17 : i32
    %42 = arith.extui %41 : i1 to i32
    %c0_i32_18 = arith.constant 0 : i32
    %43 = arith.cmpi ne, %42, %c0_i32_18 : i32
    scf.if %43 {
      %c0_19 = arith.constant 0 : index
      %c0_20 = arith.constant 0 : index
      %44 = vector.load %arg5[%c0_19, %c0_20] : memref<1x1xf32, #tpu.memory_space<vmem>>, vector<1x1xf32>
      %cst_21 = arith.constant 1.000000e-01 : f32
      %45 = vector.broadcast %cst_21 : f32 to vector<1x1xf32>
      %46 = arith.mulf %44, %45 : vector<1x1xf32>
      %c0_22 = arith.constant 0 : index
      %c0_23 = arith.constant 0 : index
      %47 = vector.load %arg4[%c0_22, %c0_23] : memref<1x1xf32, #tpu.memory_space<vmem>>, vector<1x1xf32>
      tpu.vector_store %arg4[%c0_22, %c0_23], %46 {strides = array<i32>} : memref<1x1xf32, #tpu.memory_space<vmem>>, vector<1x1xf32>,
    } else {
    }
    return
  }
  func.func @transform_0(%arg0: i32) -> (i32, i32) {
    %c0_i32 = arith.constant 0 : i32
    %c0_i32_0 = arith.constant 0 : i32
    return %arg0, %c0_i32 : i32, i32
  }
  func.func @transform_1(%arg0: i32) -> (i32, i32) {
    %c0_i32 = arith.constant 0 : i32
    %c0_i32_0 = arith.constant 0 : i32
    return %arg0, %c0_i32 : i32, i32
  }
  func.func @transform_2(%arg0: i32) -> (i32, i32) {
    %c0_i32 = arith.constant 0 : i32
    %c0_i32_0 = arith.constant 0 : i32
    return %arg0, %c0_i32 : i32, i32
  }
  func.func @transform_3(%arg0: i32) -> (i32, i32) {
    %c0_i32 = arith.constant 0 : i32
    %c0_i32_0 = arith.constant 0 : i32
    %c0_i32_1 = arith.constant 0 : i32
    return %c0_i32, %c0_i32_0 : i32, i32
  }
}

</mosaic_0001>

<llo_original>
// kernel: tpu_custom_call.1
$region0: #{tpu_custom_call.1}
  #allocation0 [shape = 'u32[]', space=smem, size = 0x4, offset = 0x4, fixed_abs, tag = 'smem constant byte address 0x4 - core index']
  #allocation1 [shape = 'u32[144,128]{1,0:T(1,128)}', space=vmem, size = 0x12000, scoped, tag = 'internal scratch']
  #allocation2 [shape = 'f32[1,1]{1,0:T(1,128)}', space=vmem, size = 0x200, scoped, tag = 'scratch operand']
  %s0 = inlined_call_operand.vmem [shape: f32[16,16], index: 0, kind: input, shape index: {}]
  %s1 = inlined_call_operand.vmem [shape: s32[16,1], index: 1, kind: input, shape index: {}]
  %s2 = inlined_call_operand.vmem [shape: f32[16,1], index: 2, kind: input, shape index: {}]
  %s3 = inlined_call_operand.hbm [shape: f32[1,1], index: 3, kind: output, shape index: {}]
  %s4 = sld [smem:[#allocation0]]
  $region30: #{tpu_custom_call.1} parent=0
    _
  %s6 = ssub.s32 1, %s4
  %s7 = scalar_select 0, %s6, %s4
  $region1: #{tpu_custom_call.1} parent=0
    #allocation3 [shape = 'u8[512]{0}', space=vmem, size = 0x400, scoped, tag = 'output window, operand 0, single buffered']
    #allocation4 [shape = 's32[1]{0}', space=sflag, size = 0x4, scoped, tag = 'scoped memory for tpu_custom_call.1']
    %8 = vsyncpa [#allocation4], 0
    // Predicated region
    $region2: #{tpu_custom_call.1} parent=1 // pred_check
      _
    $region3: #{tpu_custom_call.1} parent=1 // pred_check_branch
      %10 = sbr.rel (0) target = $region5
    $region4: #{tpu_custom_call.1} parent=1 // pred_region
      _
    $region5: #{tpu_custom_call.1} parent=1 // pred_fallthru
      _
    // Predicated region
    $region6: #{tpu_custom_call.1} parent=1 // pred_check
      _
    $region7: #{tpu_custom_call.1} parent=1 // pred_check_branch
      %12 = sbr.rel (0) target = $region9
    $region8: #{tpu_custom_call.1} parent=1 // pred_region
      _
    $region9: #{tpu_custom_call.1} parent=1 // pred_fallthru
      _
    // Predicated region
    $region10: #{tpu_custom_call.1} parent=1 // pred_check
      _
    $region11: #{tpu_custom_call.1} parent=1 // pred_check_branch
      %14 = sbr.rel (0) target = $region13
    $region12: #{tpu_custom_call.1} parent=1 // pred_region
      _
    $region13: #{tpu_custom_call.1} parent=1 // pred_fallthru
      _
    %p15 = scmp.eq.s32.totalorder 0, 0
    // Predicated region
    $region14: #{tpu_custom_call.1} parent=1 // pred_check
      %p16 = pneg %p15
    $region15: #{tpu_custom_call.1} parent=1 // pred_check_branch
      %18 = sbr.rel (%p16) target = $region17
    $region16: #{tpu_custom_call.1} parent=1 // pred_region
      %vm19 = vcmask 0
      %20 = vst.msk [vmem:[#allocation2] sm:$0x1] %vm19, 0.0
    $region17: #{tpu_custom_call.1} parent=1 // pred_fallthru
      _
    %v21 = vld [vmem:[%s0] sm:$0xff]
    %v22 = vld [vmem:[%s0 + $0x8] sm:$0xff]
    %v23 = vld [vmem:[%s1] sm:$0xff]
    %v24 = vld [vmem:[%s1 + $0x8] sm:$0xff]
    %v25 = vld [vmem:[%s2] sm:$0xff]
    %v26 = vld [vmem:[%s2 + $0x8] sm:$0xff]
    %v27 = vlaneseq
    %v28 = vand.u32 %v27, 127
    %29 = vset.pattern.permute.xlu0 0
    %30 = vperm.xlu0 %29, %v23
    %v31 = vpop.permute.xlu0 %30
    %32 = vset.pattern.permute.xlu0 0
    %33 = vperm.xlu0 %32, %v24
    %v34 = vpop.permute.xlu0 %33
    %vm35 = vcmp.eq.s32.totalorder %v28, %v31
    %vm36 = vcmp.eq.s32.totalorder %v28, %v34
    %vm37 = vcmask 130048
    %v38 = vsel %vm37, %v21, -inf
    %39 = vmax.xlane.f32.xlu0 %v38
    %v40 = vpop.xlane.xlu0 %39
    %v41 = vsel %vm37, %v22, -inf
    %42 = vmax.xlane.f32.xlu0 %v41
    %v43 = vpop.xlane.xlu0 %42
    %v44 = vsub.f32 %v21, %v40
    %v45 = vsub.f32 %v22, %v43
    %v46 = vmul.f32 %v44, 1.442695
    %v47 = vpow.pop %v46
    %v48 = vmul.f32 %v45, 1.442695
    %v49 = vpow.pop %v48
    %v50 = vsel %vm37, %v47, 0.0
    %51 = vadd.xlane.f32.xlu0 %v50
    %v52 = vpop.xlane.xlu0 %51
    %v53 = vsel %vm37, %v49, 0.0
    %54 = vadd.xlane.f32.xlu0 %v53
    %v55 = vpop.xlane.xlu0 %54
    %v56 = vsel %vm35, %v21, 0.0
    %v57 = vsel %vm36, %v22, 0.0
    %v58 = vsel %vm37, %v56, 0.0
    %59 = vadd.xlane.f32.xlu0 %v58
    %v60 = vpop.xlane.xlu0 %59
    %v61 = vsel %vm37, %v57, 0.0
    %62 = vadd.xlane.f32.xlu0 %v61
    %v63 = vpop.xlane.xlu0 %62
    %v64 = vsub.f32 %v60, %v40
    %v65 = vsub.f32 %v63, %v43
    %v66 = vlog2.pop %v52
    %v67 = vmul.f32 %v66, 0.6931472
    %v68 = vlog2.pop %v55
    %v69 = vmul.f32 %v68, 0.6931472
    %v70 = vsub.f32 %v64, %v67
    %v71 = vsub.f32 %v65, %v69
    %v72 = vmul.f32 %v70, 1.442695
    %v73 = vpow.pop %v72
    %v74 = vmul.f32 %v71, 1.442695
    %v75 = vpow.pop %v74
    %v76 = vsub.f32 1.0, %v73
    %v77 = vsub.f32 1.0, %v75
    %v78 = vmul.f32 %v76, %v76
    %v79 = vmul.f32 %v77, %v77
    %v80 = vsub.f32 0.0, %v25
    %v81 = vsub.f32 0.0, %v26
    %v82 = vmul.f32 %v80, %v78
    %v83 = vmul.f32 %v81, %v79
    %v84 = vmul.f32 %v82, %v70
    %v85 = vmul.f32 %v83, %v71
    %v86 = vld [vmem:[#allocation2] sm:$0x1]
    %vm87 = vcmask 7168
    %v88 = vsel %vm87, %v84, 0.0
    %v89 = vsel %vm87, %v85, 0.0
    %v90 = vadd.f32 %v88, %v89
    %91 = vadd.xlane.f32.xlu0 %v90
    %v92 = vpop.xlane.xlu0 %91
    %v93 = vrot.slane %v92, 4
    %v94 = vadd.f32 %v92, %v93
    %v95 = vrot.slane %v94, 2
    %v96 = vadd.f32 %v94, %v95
    %v97 = vrot.slane %v96, 1
    %v98 = vadd.f32 %v96, %v97
    %s99 = vtos %v98
    %v100 = vstv %s99
    %v101 = vadd.f32 %v86, %v100
    %vm102 = vcmask 0
    %103 = vst.msk [vmem:[#allocation2] sm:$0x1] %vm102, %v101
    // Predicated region
    $region18: #{tpu_custom_call.1} parent=1 // pred_check
      %p104 = pneg %p15
    $region19: #{tpu_custom_call.1} parent=1 // pred_check_branch
      %106 = sbr.rel (%p104) target = $region21
    $region20: #{tpu_custom_call.1} parent=1 // pred_region
      %v107 = vld [vmem:[#allocation2] sm:$0x1]
      %v108 = vmul.f32 %v107, 0.1
      %109 = vst.msk [vmem:[#allocation3] sm:$0x1] %vm102, %v108
    $region21: #{tpu_custom_call.1} parent=1 // pred_fallthru
      _
    // Predicated region
    $region22: #{tpu_custom_call.1} parent=1 // pred_check
      _
    $region23: #{tpu_custom_call.1} parent=1 // pred_check_branch
      %111 = sbr.rel (0) target = $region25
    $region24: #{tpu_custom_call.1} parent=1 // pred_region
      %s113 = ssub.s32 16, 16
      %114 = vsyncadd [#allocation4], %s113
      %s116 = sshll.u32 [#allocation3], 4
      %s117 = int_to_ptr.vmem [resolvable:$true] %s116
      %119 = dma.vmem_to_hbm [thread:$0]  %s117, 16, %s3, [#allocation4]
    $region25: #{tpu_custom_call.1} parent=1 // pred_fallthru
      _
    // Predicated region
    $region26: #{tpu_custom_call.1} parent=1 // pred_check
      _
    $region27: #{tpu_custom_call.1} parent=1 // pred_check_branch
      %121 = sbr.rel (0) target = $region29
    $region28: #{tpu_custom_call.1} parent=1 // pred_region
      %122 = dma.done [#allocation4], 16
    $region29: #{tpu_custom_call.1} parent=1 // pred_fallthru
      _
    %123 = vsyncpa [#allocation4], 1

</llo_original>
